<compile_context>
chip_gen: v5e
topology: v5e:2x2
jax: 0.10.0
libtpu: 0.0.40
codegen_flags: <defaults>
</compile_context>

<pallas_src>
import functools

import jax
import jax.numpy as jnp
from jax.experimental import pallas as pl
from jax.experimental.pallas import tpu as pltpu


_NEG_FILL = -1e30   # fill for padded scores entries
_POS_FILL = 1e30    # fill for the padded (diag - margin) operand


def _contrastive_kernel(scores_ref, dcol_ref, drow_ref, rowout_ref,
                        colmax_ref=None, *, max_violation, hardcase,
                        tiles_per_split):
    c = pl.program_id(0)          # parallel split (megacore)
    i = pl.program_id(1)          # row tile inside this split

    s = scores_ref[...].astype(jnp.float32)        # (TM, P) row tile
    dcol = dcol_ref[...]                           # (TM, 1)  diag - margin (this tile's rows)
    drow = drow_ref[...]                           # (1, P)   diag - margin (all columns)

    # cost_s  = clamp(margin + s - d1, 0) == max(s - dcol, 0)
    # cost_im = clamp(margin + s - d2, 0) == max(s - drow, 0)
    cost_s = jnp.maximum(s - dcol, 0.0)
    cost_im = jnp.maximum(s - drow, 0.0)

    if max_violation:
        tm, p = s.shape
        if not hardcase:
            # Diagonal must be excluded from the row/column maxes; this is the
            # only place that still needs the explicit eye mask.
            row_off = (c * tiles_per_split + i) * tm
            rows = jax.lax.broadcasted_iota(jnp.int32, (tm, p), 0)
            cols = jax.lax.broadcasted_iota(jnp.int32, (tm, p), 1)
            is_diag = cols == rows + row_off
            cost_s = jnp.where(is_diag, 0.0, cost_s)
            cost_im = jnp.where(is_diag, 0.0, cost_im)

        # Row maxes are tile-local: write them straight out.
        rowout_ref[...] = jnp.max(cost_s, axis=1, keepdims=True)

        # Column maxes accumulate across the row tiles of this split.  Zero
        # init is only valid because every clamped cost is >= 0 (consistent
        # with the reference, whose masked matrix also contains zeros).
        @pl.when(i == 0)
        def _init():
            colmax_ref[...] = jnp.zeros(colmax_ref.shape, colmax_ref.dtype)

        tile_cmax = jnp.max(cost_im, axis=0, keepdims=True)        # (1, P)
        colmax_ref[...] = jnp.maximum(colmax_ref[...], tile_cmax)   # (8, P) broadcast
    else:
        # Single fused reduction; the (not hardcase) diagonal contribution is
        # removed exactly in the wrapper.
        rowout_ref[...] = jnp.sum(cost_s + cost_im, axis=1, keepdims=True)


def _round_up(x, m):
    return -(-x // m) * m


def _vmem_budget():
    """(vmem_limit_bytes, max_tile_bytes) tuned per TPU generation."""
    try:
        cap = int(getattr(pltpu.get_tpu_info(), "vmem_capacity_bytes", 0) or 0)
    except Exception:
        cap = 0
    if cap == 0 or cap <= 80 * 1024 * 1024:          # v7x-class: 64 MiB / core (or unknown)
        return 40 * 1024 * 1024, 4 * 1024 * 1024
    return 96 * 1024 * 1024, 16 * 1024 * 1024        # v5e / v6e: 128 MiB


def _choose_tiling(n, max_tile_bytes):
    """Pick (tile_rows, padded_n) with tile_rows % 8 == 0, padded_n % tile_rows == 0.

    The (TM, P) block working set is budgeted at 4 B/elem (in-kernel f32 math).
    """
    p = _round_up(n, 8)
    if p * p * 4 <= max_tile_bytes:
        return p, p
    tm = p
    for _ in range(4):   # converges in <= 2 iterations
        tm = max(8, min(p, (max_tile_bytes // (p * 4)) // 8 * 8))
        new_p = _round_up(n, tm)
        if new_p == p:
            break
        p = new_p
    return tm, _round_up(n, tm)


def contrastive_loss(scores, margin=0.0, max_violation=False, hardcase=False,
                     tile_rows=None):
    """Returns (loss, diagonal) matching ContrastiveLoss.forward."""
    n = scores.shape[0]
    assert scores.shape == (n, n), "scores must be square"

    vmem_limit, max_tile_bytes = _vmem_budget()

    if tile_rows is None:
        tm, p = _choose_tiling(n, max_tile_bytes)
    else:
        tm = _round_up(int(tile_rows), 8)
        p = _round_up(n, tm)

    num_tiles = p // tm
    num_splits = 2 if (num_tiles >= 2 and num_tiles % 2 == 0) else 1
    tps = num_tiles // num_splits

    diag = jnp.diagonal(scores)                       # (N,) original dtype
    diag_f32 = diag.astype(jnp.float32)
    d = diag_f32 - jnp.float32(margin)                # margin folded in

    pad = p - n
    if pad:
        # Padded scores are hugely negative and their diag operand hugely
        # positive, so every padded entry clamps to exactly 0 on every path.
        scores_p = jnp.pad(scores, ((0, pad), (0, pad)),
                           constant_values=_NEG_FILL)
        d_p = jnp.concatenate([d, jnp.full((pad,), _POS_FILL, jnp.float32)])
    else:
        scores_p, d_p = scores, d
    dcol = d_p.reshape(p, 1)
    drow = d_p.reshape(1, p)

    kernel = functools.partial(
        _contrastive_kernel,
        max_violation=bool(max_violation),
        hardcase=bool(hardcase),
        tiles_per_split=int(tps),
    )

    row_idx = lambda c, i: (c * tps + i, 0)

    out_shapes = [jax.ShapeDtypeStruct((p, 1), jnp.float32)]        # per-row sum/max
    out_specs = [pl.BlockSpec((tm, 1), row_idx)]
    if max_violation:
        # Sublane-aligned per-split column-max accumulator (8 identical rows
        # per split keeps the block (8, P)-tiled).
        out_shapes.append(jax.ShapeDtypeStruct((num_splits * 8, p), jnp.float32))
        out_specs.append(pl.BlockSpec((8, p), lambda c, i: (c, 0)))

    outs = pl.pallas_call(
        kernel,
        out_shape=tuple(out_shapes),
        grid=(num_splits, tps),
        in_specs=[
            pl.BlockSpec((tm, p), row_idx),                 # row tile of (padded) scores
            pl.BlockSpec((tm, 1), row_idx),                 # diag - margin, column slice
            pl.BlockSpec((1, p), lambda c, i: (0, 0)),      # diag - margin, full row
        ],
        out_specs=tuple(out_specs),
        compiler_params=pltpu.CompilerParams(
            # Column maxes carry state across row tiles -> "arbitrary" there;
            # the sum path has no carried state, so both axes are parallel.
            dimension_semantics=("parallel",
                                 "arbitrary" if max_violation else "parallel"),
            vmem_limit_bytes=vmem_limit,
        ),
    )(scores_p, dcol, drow)

    if max_violation:
        rowout, colmax = outs
        loss = jnp.sum(rowout) + jnp.sum(jnp.max(colmax, axis=0))
    else:
        (rowout,) = outs
        loss = jnp.sum(rowout)
        if not hardcase:
            # Diagonal entries of cost_s / cost_im were included in the kernel
            # sums; remove them using the exact same f32 operands the kernel
            # saw (same values per entry, so no closed-form-margin residual).
            loss = loss - 2.0 * jnp.sum(jnp.maximum(diag_f32 - d, 0.0))

    # The PyTorch module returns the diagonal as an (N, 1) column.
    return loss, diag.reshape(n, 1)


def _reference(scores, margin=0.0, max_violation=False, hardcase=False):
    """Pure-JAX reference mirroring the PyTorch forward."""
    scores = scores.astype(jnp.float32)
    n = scores.shape[0]
    diag = jnp.diag(scores).reshape(-1, 1)
    cost_s = jnp.maximum(margin + scores - diag, 0.0)
    cost_im = jnp.maximum(margin + scores - diag.T, 0.0)
    if not hardcase:
        eye = jnp.eye(n, dtype=bool)
        cost_s = jnp.where(eye, 0.0, cost_s)
        cost_im = jnp.where(eye, 0.0, cost_im)
    if max_violation:
        cost_s = jnp.max(cost_s, axis=1)
        cost_im = jnp.max(cost_im, axis=0)
    return jnp.sum(cost_s) + jnp.sum(cost_im), diag


if __name__ == "__main__":
    root = jax.random.PRNGKey(0)
    k1, k2, k3 = jax.random.split(root, 3)

    configs = (
        dict(margin=0.0, max_violation=False, hardcase=False),
        dict(margin=0.2, max_violation=False, hardcase=False),
        dict(margin=0.2, max_violation=True, hardcase=False),
        dict(margin=0.2, max_violation=False, hardcase=True),
        dict(margin=0.2, max_violation=True, hardcase=True),
    )

    # --- single-block path (f32) ---
    n = 128
    scores = jax.random.normal(k1, (n, n), dtype=jnp.float32)
    for cfg in configs:
        loss, diag = contrastive_loss(scores, **cfg)
        loss = jax.block_until_ready(loss)
        ref_loss, _ = _reference(scores, **cfg)
        assert jnp.allclose(loss, ref_loss, rtol=1e-5, atol=1e-2), (cfg, loss, ref_loss)
        assert jnp.allclose(diag, jnp.diag(scores).reshape(-1, 1)), cfg

    # --- multi-tile grid + megacore split (bf16 input) ---
    n2 = 256
    scores2 = jax.random.normal(k2, (n2, n2), dtype=jnp.bfloat16)
    for cfg in (dict(margin=0.1, max_violation=False, hardcase=False),
                dict(margin=0.1, max_violation=True, hardcase=False)):
        loss2, _ = contrastive_loss(scores2, tile_rows=64, **cfg)
        loss2 = jax.block_until_ready(loss2)
        ref_loss2, _ = _reference(scores2, **cfg)
        assert jnp.allclose(loss2, ref_loss2, rtol=1e-3, atol=2e-1), (cfg, loss2, ref_loss2)

    # --- ragged N (pad + masked tiles), multi-tile ---
    n3 = 200
    scores3 = jax.random.normal(k3, (n3, n3), dtype=jnp.float32)
    for cfg in (dict(margin=0.2, max_violation=False, hardcase=False),
                dict(margin=0.2, max_violation=True, hardcase=False),
                dict(margin=0.2, max_violation=True, hardcase=True)):
        loss3, diag3 = contrastive_loss(scores3, tile_rows=64, **cfg)
        loss3 = jax.block_until_ready(loss3)
        ref_loss3, _ = _reference(scores3, **cfg)
        assert jnp.allclose(loss3, ref_loss3, rtol=1e-5, atol=1e-2), (cfg, loss3, ref_loss3)
        assert diag3.shape == (n3, 1)

    print("KERNEL_OK")
</pallas_src>

<mosaic_0001>
module attributes {stable_mosaic.version = 11 : i64} {
  func.func @_contrastive_kernel(%arg0: i32, %arg1: i32, %arg2: memref<128x128xf32, #tpu.memory_space<vmem>>, %arg3: memref<128x1xf32, #tpu.memory_space<vmem>>, %arg4: memref<1x128xf32, #tpu.memory_space<vmem>>, %arg5: memref<128x1xf32, #tpu.memory_space<vmem>>) attributes {dimension_semantics = [#tpu.dimension_semantics<parallel>, #tpu.dimension_semantics<parallel>], iteration_bounds = array<i64: 1, 1>, scalar_prefetch = 0 : i64, scratch_operands = 0 : i64, tpu.core_type = #tpu.core_type<tc>, window_params = [{transform_indices = @transform_0, window_bounds = array<i64: 128, 128>}, {transform_indices = @transform_1, window_bounds = array<i64: 128, 1>}, {pipeline_mode = #tpu.pipeline_mode<synchronous>, transform_indices = @transform_2, window_bounds = array<i64: 1, 128>}, {transform_indices = @transform_3, window_bounds = array<i64: 128, 1>}]} {
    %c0 = arith.constant 0 : index
    %c0_0 = arith.constant 0 : index
    %0 = vector.load %arg2[%c0, %c0_0] : memref<128x128xf32, #tpu.memory_space<vmem>>, vector<128x128xf32>
    %c0_1 = arith.constant 0 : index
    %c0_2 = arith.constant 0 : index
    %1 = vector.load %arg3[%c0_1, %c0_2] : memref<128x1xf32, #tpu.memory_space<vmem>>, vector<128x1xf32>
    %c0_3 = arith.constant 0 : index
    %c0_4 = arith.constant 0 : index
    %2 = vector.load %arg4[%c0_3, %c0_4] : memref<1x128xf32, #tpu.memory_space<vmem>>, vector<1x128xf32>
    %3 = vector.broadcast %1 : vector<128x1xf32> to vector<128x128xf32>
    %4 = arith.subf %0, %3 : vector<128x128xf32>
    %cst = arith.constant 0.000000e+00 : f32
    %5 = vector.broadcast %cst : f32 to vector<128x128xf32>
    %6 = arith.maximumf %4, %5 : vector<128x128xf32>
    %7 = vector.broadcast %2 : vector<1x128xf32> to vector<128x128xf32>
    %8 = arith.subf %0, %7 : vector<128x128xf32>
    %cst_5 = arith.constant 0.000000e+00 : f32
    %9 = vector.broadcast %cst_5 : f32 to vector<128x128xf32>
    %10 = arith.maximumf %8, %9 : vector<128x128xf32>
    %11 = arith.addf %6, %10 : vector<128x128xf32>
    %cst_6 = arith.constant dense<0.000000e+00> : vector<128xf32>
    %12 = vector.multi_reduction <add>, %11, %cst_6 [1] : vector<128x128xf32> to vector<128xf32>
    %13 = vector.shape_cast %12 : vector<128xf32> to vector<128x1xf32>
    %c0_7 = arith.constant 0 : index
    %c0_8 = arith.constant 0 : index
    %14 = vector.load %arg5[%c0_7, %c0_8] : memref<128x1xf32, #tpu.memory_space<vmem>>, vector<128x1xf32>
    tpu.vector_store %arg5[%c0_7, %c0_8], %13 {strides = array<i32>} : memref<128x1xf32, #tpu.memory_space<vmem>>, vector<128x1xf32>,
    return
  }
  func.func @transform_0(%arg0: i32, %arg1: i32) -> (i32, i32) {
    %c1_i32 = arith.constant 1 : i32
    %0 = arith.muli %arg0, %c1_i32 : i32
    %1 = arith.addi %0, %arg1 : i32
    %c0_i32 = arith.constant 0 : i32
    %c0_i32_0 = arith.constant 0 : i32
    return %1, %c0_i32 : i32, i32
  }
  func.func @transform_1(%arg0: i32, %arg1: i32) -> (i32, i32) {
    %c1_i32 = arith.constant 1 : i32
    %0 = arith.muli %arg0, %c1_i32 : i32
    %1 = arith.addi %0, %arg1 : i32
    %c0_i32 = arith.constant 0 : i32
    %c0_i32_0 = arith.constant 0 : i32
    return %1, %c0_i32 : i32, i32
  }
  func.func @transform_2(%arg0: i32, %arg1: i32) -> (i32, i32) {
    %c0_i32 = arith.constant 0 : i32
    %c0_i32_0 = arith.constant 0 : i32
    %c0_i32_1 = arith.constant 0 : i32
    return %c0_i32, %c0_i32_0 : i32, i32
  }
  func.func @transform_3(%arg0: i32, %arg1: i32) -> (i32, i32) {
    %c1_i32 = arith.constant 1 : i32
    %0 = arith.muli %arg0, %c1_i32 : i32
    %1 = arith.addi %0, %arg1 : i32
    %c0_i32 = arith.constant 0 : i32
    %c0_i32_0 = arith.constant 0 : i32
    return %1, %c0_i32 : i32, i32
  }
}

</mosaic_0001>

<llo_original>
// kernel: tpu_custom_call.1
$region0: #{tpu_custom_call.1}
  #allocation0 [shape = 'u32[]', space=smem, size = 0x4, offset = 0x4, fixed_abs, tag = 'smem constant byte address 0x4 - core index']
  #allocation1 [shape = 'u32[72,128]{1,0:T(1,128)}', space=vmem, size = 0x9000, scoped, tag = 'internal scratch']
  %s0 = inlined_call_operand.vmem [shape: f32[128,128], index: 0, kind: input, shape index: {}]
  %s1 = inlined_call_operand.vmem [shape: f32[128,1], index: 1, kind: input, shape index: {}]
  %s2 = inlined_call_operand.vmem [shape: f32[1,128], index: 2, kind: input, shape index: {}]
  %s3 = inlined_call_operand.vmem [shape: f32[128,1], index: 3, kind: output, shape index: {}]
  %s4 = sld [smem:[#allocation0]]
  $region22: #{tpu_custom_call.1} parent=0
    _
  %s6 = ssub.s32 1, %s4
  %s7 = scalar_select 0, %s6, %s4
  // Predicated region
  $region2: #{tpu_custom_call.1} parent=0 // pred_check
    _
  $region3: #{tpu_custom_call.1} parent=0 // pred_check_branch
    %9 = sbr.rel (0) target = $region5
  $region4: #{tpu_custom_call.1} parent=0 // pred_region
    %s10 = sadd.s32 0, 0
    %s11 = smul.u32 16, %s10
    %p12 = scmp.lt.s32.totalorder %s11, 15
    %s13 = scalar_select %p12, %s11, 15
    %s14 = smul.addr %s13, 8
    %s15 = scalar_lea.vmem %s0, %s14
    %s16 = sadd.s32 0, 0
    %s17 = smul.u32 16, %s16
  $region5: #{tpu_custom_call.1} parent=0 // pred_fallthru
    _
  // Predicated region
  $region6: #{tpu_custom_call.1} parent=0 // pred_check
    _
  $region7: #{tpu_custom_call.1} parent=0 // pred_check_branch
    %19 = sbr.rel (0) target = $region9
  $region8: #{tpu_custom_call.1} parent=0 // pred_region
    %s20 = sadd.s32 0, 0
    %s21 = smul.u32 16, %s20
    %p22 = scmp.lt.s32.totalorder %s21, 15
    %s23 = scalar_select %p22, %s21, 15
    %s24 = smul.addr %s23, 8
    %s25 = scalar_lea.vmem %s1, %s24
    %s26 = sadd.s32 0, 0
    %s27 = smul.u32 16, %s26
  $region9: #{tpu_custom_call.1} parent=0 // pred_fallthru
    _
  // Predicated region
  $region10: #{tpu_custom_call.1} parent=0 // pred_check
    _
  $region11: #{tpu_custom_call.1} parent=0 // pred_check_branch
    %29 = sbr.rel (0) target = $region13
  $region12: #{tpu_custom_call.1} parent=0 // pred_region
    _
  $region13: #{tpu_custom_call.1} parent=0 // pred_fallthru
    _
  %s30 = sadd.s32 0, 0
  %s31 = smul.u32 16, %s30
  %p32 = scmp.lt.s32.totalorder %s31, 15
  %s33 = scalar_select %p32, %s31, 15
  %s34 = smul.addr %s33, 8
  %s35 = scalar_lea.vmem %s0, %s34
  %s36 = sadd.s32 0, 0
  %s37 = smul.u32 16, %s36
  %p38 = scmp.lt.s32.totalorder %s37, 15
  %s39 = scalar_select %p38, %s37, 15
  %s40 = smul.addr %s39, 8
  %s41 = scalar_lea.vmem %s1, %s40
  %s42 = sadd.s32 0, 0
  %s43 = smul.u32 16, %s42
  %p44 = scmp.lt.s32.totalorder %s43, 15
  %s45 = scalar_select %p44, %s43, 15
  %s46 = smul.addr %s45, 8
  %s47 = scalar_lea.vmem %s3, %s46
  %s48 = sadd.s32 0, 0
  %s49 = smul.u32 16, %s48
  %p50 = scmp.lt.s32.totalorder %s49, 15
  %s51 = scalar_select %p50, %s49, 15
  %s52 = smul.addr %s51, 8
  %s53 = scalar_lea.vmem %s0, %s52
  %s54 = sadd.s32 0, 0
  %s55 = smul.u32 16, %s54
  %s56 = sadd.s32 0, 0
  %s57 = smul.u32 16, %s56
  %p58 = scmp.lt.s32.totalorder %s57, 15
  %s59 = scalar_select %p58, %s57, 15
  %s60 = smul.addr %s59, 8
  %s61 = scalar_lea.vmem %s1, %s60
  %s62 = sadd.s32 0, 0
  %s63 = smul.u32 16, %s62
  %s64 = sadd.s32 0, 0
  %s65 = smul.u32 16, %s64
  %p66 = scmp.lt.s32.totalorder %s65, 15
  %s67 = scalar_select %p66, %s65, 15
  %s68 = smul.addr %s67, 8
  %s69 = scalar_lea.vmem %s3, %s68
  %s70 = sadd.s32 0, 0
  %s71 = smul.u32 16, %s70
  %v72 = vld [vmem:[%s53] sm:$0xff]
  %v73 = vld [vmem:[%s53 + $0x8] sm:$0xff]
  %v74 = vld [vmem:[%s53 + $0x10] sm:$0xff]
  %v75 = vld [vmem:[%s53 + $0x18] sm:$0xff]
  %v76 = vld [vmem:[%s53 + $0x20] sm:$0xff]
  %v77 = vld [vmem:[%s53 + $0x28] sm:$0xff]
  %v78 = vld [vmem:[%s53 + $0x30] sm:$0xff]
  %v79 = vld [vmem:[%s53 + $0x38] sm:$0xff]
  %v80 = vld [vmem:[%s53 + $0x40] sm:$0xff]
  %v81 = vld [vmem:[%s53 + $0x48] sm:$0xff]
  %v82 = vld [vmem:[%s53 + $0x50] sm:$0xff]
  %v83 = vld [vmem:[%s53 + $0x58] sm:$0xff]
  %v84 = vld [vmem:[%s53 + $0x60] sm:$0xff]
  %v85 = vld [vmem:[%s53 + $0x68] sm:$0xff]
  %v86 = vld [vmem:[%s53 + $0x70] sm:$0xff]
  %v87 = vld [vmem:[%s53 + $0x78] sm:$0xff]
  %v88 = vld [vmem:[%s61] sm:$0xff]
  %v89 = vld [vmem:[%s61 + $0x8] sm:$0xff]
  %v90 = vld [vmem:[%s61 + $0x10] sm:$0xff]
  %v91 = vld [vmem:[%s61 + $0x18] sm:$0xff]
  %v92 = vld [vmem:[%s61 + $0x20] sm:$0xff]
  %v93 = vld [vmem:[%s61 + $0x28] sm:$0xff]
  %v94 = vld [vmem:[%s61 + $0x30] sm:$0xff]
  %v95 = vld [vmem:[%s61 + $0x38] sm:$0xff]
  %v96 = vld [vmem:[%s61 + $0x40] sm:$0xff]
  %v97 = vld [vmem:[%s61 + $0x48] sm:$0xff]
  %v98 = vld [vmem:[%s61 + $0x50] sm:$0xff]
  %v99 = vld [vmem:[%s61 + $0x58] sm:$0xff]
  %v100 = vld [vmem:[%s61 + $0x60] sm:$0xff]
  %v101 = vld [vmem:[%s61 + $0x68] sm:$0xff]
  %v102 = vld [vmem:[%s61 + $0x70] sm:$0xff]
  %v103 = vld [vmem:[%s61 + $0x78] sm:$0xff]
  %v104 = vld [vmem:[%s2] sm:$0x1]
  %106 = vset.pattern.permute.xlu0 0
  %107 = vperm.xlu0 %106, %v88
  %v108 = vpop.permute.xlu0 %107
  %111 = vset.pattern.permute.xlu0 0
  %112 = vperm.xlu0 %111, %v89
  %v113 = vpop.permute.xlu0 %112
  %116 = vset.pattern.permute.xlu0 0
  %117 = vperm.xlu0 %116, %v90
  %v118 = vpop.permute.xlu0 %117
  %121 = vset.pattern.permute.xlu0 0
  %122 = vperm.xlu0 %121, %v91
  %v123 = vpop.permute.xlu0 %122
  %126 = vset.pattern.permute.xlu0 0
  %127 = vperm.xlu0 %126, %v92
  %v128 = vpop.permute.xlu0 %127
  %131 = vset.pattern.permute.xlu0 0
  %132 = vperm.xlu0 %131, %v93
  %v133 = vpop.permute.xlu0 %132
  %136 = vset.pattern.permute.xlu0 0
  %137 = vperm.xlu0 %136, %v94
  %v138 = vpop.permute.xlu0 %137
  %141 = vset.pattern.permute.xlu0 0
  %142 = vperm.xlu0 %141, %v95
  %v143 = vpop.permute.xlu0 %142
  %146 = vset.pattern.permute.xlu0 0
  %147 = vperm.xlu0 %146, %v96
  %v148 = vpop.permute.xlu0 %147
  %151 = vset.pattern.permute.xlu0 0
  %152 = vperm.xlu0 %151, %v97
  %v153 = vpop.permute.xlu0 %152
  %156 = vset.pattern.permute.xlu0 0
  %157 = vperm.xlu0 %156, %v98
  %v158 = vpop.permute.xlu0 %157
  %161 = vset.pattern.permute.xlu0 0
  %162 = vperm.xlu0 %161, %v99
  %v163 = vpop.permute.xlu0 %162
  %166 = vset.pattern.permute.xlu0 0
  %167 = vperm.xlu0 %166, %v100
  %v168 = vpop.permute.xlu0 %167
  %171 = vset.pattern.permute.xlu0 0
  %172 = vperm.xlu0 %171, %v101
  %v173 = vpop.permute.xlu0 %172
  %176 = vset.pattern.permute.xlu0 0
  %177 = vperm.xlu0 %176, %v102
  %v178 = vpop.permute.xlu0 %177
  %181 = vset.pattern.permute.xlu0 0
  %182 = vperm.xlu0 %181, %v103
  %v183 = vpop.permute.xlu0 %182
  %v185 = vsub.f32 %v72, %v108
  %v186 = vsub.f32 %v73, %v113
  %v187 = vsub.f32 %v74, %v118
  %v188 = vsub.f32 %v75, %v123
  %v189 = vsub.f32 %v76, %v128
  %v190 = vsub.f32 %v77, %v133
  %v191 = vsub.f32 %v78, %v138
  %v192 = vsub.f32 %v79, %v143
  %v193 = vsub.f32 %v80, %v148
  %v194 = vsub.f32 %v81, %v153
  %v195 = vsub.f32 %v82, %v158
  %v196 = vsub.f32 %v83, %v163
  %v197 = vsub.f32 %v84, %v168
  %v198 = vsub.f32 %v85, %v173
  %v199 = vsub.f32 %v86, %v178
  %v200 = vsub.f32 %v87, %v183
  %v201 = vmax.f32 %v185, 0.0
  %v202 = vmax.f32 %v186, 0.0
  %v203 = vmax.f32 %v187, 0.0
  %v204 = vmax.f32 %v188, 0.0
  %v205 = vmax.f32 %v189, 0.0
  %v206 = vmax.f32 %v190, 0.0
  %v207 = vmax.f32 %v191, 0.0
  %v208 = vmax.f32 %v192, 0.0
  %v209 = vmax.f32 %v193, 0.0
  %v210 = vmax.f32 %v194, 0.0
  %v211 = vmax.f32 %v195, 0.0
  %v212 = vmax.f32 %v196, 0.0
  %v213 = vmax.f32 %v197, 0.0
  %v214 = vmax.f32 %v198, 0.0
  %v215 = vmax.f32 %v199, 0.0
  %v216 = vmax.f32 %v200, 0.0
  %v218 = vperm.slane %v104, 0
  %v220 = vsub.f32 %v72, %v218
  %v221 = vsub.f32 %v73, %v218
  %v222 = vsub.f32 %v74, %v218
  %v223 = vsub.f32 %v75, %v218
  %v224 = vsub.f32 %v76, %v218
  %v225 = vsub.f32 %v77, %v218
  %v226 = vsub.f32 %v78, %v218
  %v227 = vsub.f32 %v79, %v218
  %v228 = vsub.f32 %v80, %v218
  %v229 = vsub.f32 %v81, %v218
  %v230 = vsub.f32 %v82, %v218
  %v231 = vsub.f32 %v83, %v218
  %v232 = vsub.f32 %v84, %v218
  %v233 = vsub.f32 %v85, %v218
  %v234 = vsub.f32 %v86, %v218
  %v235 = vsub.f32 %v87, %v218
  %v236 = vmax.f32 %v220, 0.0
  %v237 = vmax.f32 %v221, 0.0
  %v238 = vmax.f32 %v222, 0.0
  %v239 = vmax.f32 %v223, 0.0
  %v240 = vmax.f32 %v224, 0.0
  %v241 = vmax.f32 %v225, 0.0
  %v242 = vmax.f32 %v226, 0.0
  %v243 = vmax.f32 %v227, 0.0
  %v244 = vmax.f32 %v228, 0.0
  %v245 = vmax.f32 %v229, 0.0
  %v246 = vmax.f32 %v230, 0.0
  %v247 = vmax.f32 %v231, 0.0
  %v248 = vmax.f32 %v232, 0.0
  %v249 = vmax.f32 %v233, 0.0
  %v250 = vmax.f32 %v234, 0.0
  %v251 = vmax.f32 %v235, 0.0
  %v252 = vadd.f32 %v201, %v236
  %v253 = vadd.f32 %v202, %v237
  %v254 = vadd.f32 %v203, %v238
  %v255 = vadd.f32 %v204, %v239
  %v256 = vadd.f32 %v205, %v240
  %v257 = vadd.f32 %v206, %v241
  %v258 = vadd.f32 %v207, %v242
  %v259 = vadd.f32 %v208, %v243
  %v260 = vadd.f32 %v209, %v244
  %v261 = vadd.f32 %v210, %v245
  %v262 = vadd.f32 %v211, %v246
  %v263 = vadd.f32 %v212, %v247
  %v264 = vadd.f32 %v213, %v248
  %v265 = vadd.f32 %v214, %v249
  %v266 = vadd.f32 %v215, %v250
  %v267 = vadd.f32 %v216, %v251
  %268 = vadd.xlane.f32.xlu0 %v252
  %v269 = vpop.xlane.xlu0 %268
  %270 = vadd.xlane.f32.xlu0 %v253
  %v271 = vpop.xlane.xlu0 %270
  %272 = vadd.xlane.f32.xlu0 %v254
  %v273 = vpop.xlane.xlu0 %272
  %274 = vadd.xlane.f32.xlu0 %v255
  %v275 = vpop.xlane.xlu0 %274
  %276 = vadd.xlane.f32.xlu0 %v256
  %v277 = vpop.xlane.xlu0 %276
  %278 = vadd.xlane.f32.xlu0 %v257
  %v279 = vpop.xlane.xlu0 %278
  %280 = vadd.xlane.f32.xlu0 %v258
  %v281 = vpop.xlane.xlu0 %280
  %282 = vadd.xlane.f32.xlu0 %v259
  %v283 = vpop.xlane.xlu0 %282
  %284 = vadd.xlane.f32.xlu0 %v260
  %v285 = vpop.xlane.xlu0 %284
  %286 = vadd.xlane.f32.xlu0 %v261
  %v287 = vpop.xlane.xlu0 %286
  %288 = vadd.xlane.f32.xlu0 %v262
  %v289 = vpop.xlane.xlu0 %288
  %290 = vadd.xlane.f32.xlu0 %v263
  %v291 = vpop.xlane.xlu0 %290
  %292 = vadd.xlane.f32.xlu0 %v264
  %v293 = vpop.xlane.xlu0 %292
  %294 = vadd.xlane.f32.xlu0 %v265
  %v295 = vpop.xlane.xlu0 %294
  %296 = vadd.xlane.f32.xlu0 %v266
  %v297 = vpop.xlane.xlu0 %296
  %298 = vadd.xlane.f32.xlu0 %v267
  %v299 = vpop.xlane.xlu0 %298
  %vm300 = vcmask 7168
  %301 = vst.msk [vmem:[%s69] sm:$0xff] %vm300, %v269
  %302 = vst.msk [vmem:[%s69 + $0x8] sm:$0xff] %vm300, %v271
  %303 = vst.msk [vmem:[%s69 + $0x10] sm:$0xff] %vm300, %v273
  %304 = vst.msk [vmem:[%s69 + $0x18] sm:$0xff] %vm300, %v275
  %305 = vst.msk [vmem:[%s69 + $0x20] sm:$0xff] %vm300, %v277
  %306 = vst.msk [vmem:[%s69 + $0x28] sm:$0xff] %vm300, %v279
  %307 = vst.msk [vmem:[%s69 + $0x30] sm:$0xff] %vm300, %v281
  %308 = vst.msk [vmem:[%s69 + $0x38] sm:$0xff] %vm300, %v283
  %309 = vst.msk [vmem:[%s69 + $0x40] sm:$0xff] %vm300, %v285
  %310 = vst.msk [vmem:[%s69 + $0x48] sm:$0xff] %vm300, %v287
  %311 = vst.msk [vmem:[%s69 + $0x50] sm:$0xff] %vm300, %v289
  %312 = vst.msk [vmem:[%s69 + $0x58] sm:$0xff] %vm300, %v291
  %313 = vst.msk [vmem:[%s69 + $0x60] sm:$0xff] %vm300, %v293
  %314 = vst.msk [vmem:[%s69 + $0x68] sm:$0xff] %vm300, %v295
  %315 = vst.msk [vmem:[%s69 + $0x70] sm:$0xff] %vm300, %v297
  %316 = vst.msk [vmem:[%s69 + $0x78] sm:$0xff] %vm300, %v299
  %s317 = sadd.s32 0, 0
  %s318 = smul.u32 16, %s317
  %p319 = scmp.lt.s32.totalorder %s318, 15
  %s320 = scalar_select %p319, %s318, 15
  %s321 = smul.addr %s320, 8
  %s322 = scalar_lea.vmem %s3, %s321
  // Predicated region
  $region14: #{tpu_custom_call.1} parent=0 // pred_check
    _
  $region15: #{tpu_custom_call.1} parent=0 // pred_check_branch
    %324 = sbr.rel (0) target = $region17
  $region16: #{tpu_custom_call.1} parent=0 // pred_region
    %s325 = sadd.s32 0, 0
    %s326 = smul.u32 16, %s325
  $region17: #{tpu_custom_call.1} parent=0 // pred_fallthru
    _
  // Predicated region
  $region18: #{tpu_custom_call.1} parent=0 // pred_check
    _
  $region19: #{tpu_custom_call.1} parent=0 // pred_check_branch
    %328 = sbr.rel (0) target = $region21
  $region20: #{tpu_custom_call.1} parent=0 // pred_region
    %s329 = sadd.s32 0, 0
    %s330 = smul.u32 16, %s329
    %p331 = scmp.lt.s32.totalorder %s330, 15
    %s332 = scalar_select %p331, %s330, 15
    %s333 = smul.addr %s332, 8
    %s334 = scalar_lea.vmem %s3, %s333
  $region21: #{tpu_custom_call.1} parent=0 // pred_fallthru
    _

</llo_original>
